<compile_context>
chip_gen: v7x
topology: tpu7x:2x2x1
jax: 0.10.0
libtpu: 0.0.40
codegen_flags: <defaults>
</compile_context>

<pallas_src>
import functools

import jax
import jax.numpy as jnp
from jax import lax
from jax.experimental import pallas as pl
from jax.experimental.pallas import tpu as pltpu

MSE_WEIGHT = 0.9
COSINE_WEIGHT = 0.1
L2_WEIGHT = 1e-5
_EPS = 1e-8                              # torch cosine-similarity eps clamp
_ROW_TILE_CAP = 512                      # ~85% of HBM roofline per tile sweeps
_VMEM_STREAM_BUDGET = 16 * 1024 * 1024   # bytes: 2 inputs x 2 pipeline buffers


def _round_up(v, m):
    return ((v + m - 1) // m) * m


# -----------------------------------------------------------------------------
# Kernel 1: streaming partial sums for MSE + cosine over (N, D).
# grid = (num_splits, tiles_per_split).  Output block index is constant along
# the inner ("arbitrary") axis, so the output blocks act as accumulators.
# -----------------------------------------------------------------------------
def _partial_sums_kernel(x_ref, y_ref, sq_ref, cos_ref):
    t = pl.program_id(1)

    @pl.when(t == 0)
    def _init():
        sq_ref[...] = jnp.zeros_like(sq_ref)
        cos_ref[...] = jnp.zeros_like(cos_ref)

    x = x_ref[...].astype(jnp.float32)              # (TILE_N, D)
    y = y_ref[...].astype(jnp.float32)

    s_xx = jnp.sum(x * x, axis=1, keepdims=True)    # (TILE_N, 1)
    s_yy = jnp.sum(y * y, axis=1, keepdims=True)
    s_xy = jnp.sum(x * y, axis=1, keepdims=True)

    # Fused MSE numerator: sum((x - y)^2) = s_xx - 2 s_xy + s_yy
    sq_ref[...] += s_xx - 2.0 * s_xy + s_yy
    # cos = dot / max(||x||*||y||, eps) == dot * rsqrt(max(s_xx*s_yy, eps^2))
    cos_ref[...] += s_xy * lax.rsqrt(jnp.maximum(s_xx * s_yy, _EPS * _EPS))


# -----------------------------------------------------------------------------
# Kernel 2: sum of per-parameter Frobenius norms from a packed (R, 128) slab.
# Parameter boundaries arrive as flat-element offsets in SMEM.
# -----------------------------------------------------------------------------
def _l2_kernel(offs_ref, slab_ref, l2_ref, *, num_params):
    x = slab_ref[...].astype(jnp.float32)           # (R, 128), zero tail pad
    xsq = x * x
    r, c = x.shape
    row_idx = lax.broadcasted_iota(jnp.int32, (r, c), 0)
    lane_idx = lax.broadcasted_iota(jnp.int32, (r, c), 1)
    flat_idx = row_idx * c + lane_idx

    total = jnp.zeros((1, 1), jnp.float32)
    for p in range(num_params):                     # static, small
        start = offs_ref[p]
        end = offs_ref[p + 1]
        mask = (flat_idx >= start) & (flat_idx < end)
        ssq = jnp.sum(jnp.where(mask, xsq, 0.0), keepdims=True)   # (1, 1)
        total = total + jnp.sqrt(ssq)
    l2_ref[...] = total


# -----------------------------------------------------------------------------
# Wrapper
# -----------------------------------------------------------------------------
def regularized_combined_loss(output, target, params,
                              mse_weight=MSE_WEIGHT,
                              cosine_weight=COSINE_WEIGHT,
                              l2_weight=L2_WEIGHT):
    assert output.ndim == 2 and output.shape == target.shape
    n, d = output.shape

    # ---- tile sizing: keep 2 inputs x 2 pipeline buffers inside budget -----
    n8 = _round_up(n, 8)
    budget_rows = max(8, (_VMEM_STREAM_BUDGET // (2 * 2 * 4 * d)) // 8 * 8)
    tile_n = min(_ROW_TILE_CAP, n8, budget_rows)
    tiles_total = pl.cdiv(n8, tile_n)
    num_splits = 2 if tiles_total >= 2 else 1       # v7x: one split per TC
    tiles_padded = _round_up(tiles_total, num_splits)
    tiles_per_split = tiles_padded // num_splits
    n_pad = tiles_padded * tile_n

    x, y = output, target
    if n_pad > n:   # zero rows contribute 0 to every partial sum
        x = jnp.pad(x, ((0, n_pad - n), (0, 0)))
        y = jnp.pad(y, ((0, n_pad - n), (0, 0)))

    sq_parts, cos_parts = pl.pallas_call(
        _partial_sums_kernel,
        out_shape=(jax.ShapeDtypeStruct((num_splits * tile_n, 1), jnp.float32),
                   jax.ShapeDtypeStruct((num_splits * tile_n, 1), jnp.float32)),
        grid_spec=pltpu.PrefetchScalarGridSpec(
            num_scalar_prefetch=0,
            grid=(num_splits, tiles_per_split),
            in_specs=[
                pl.BlockSpec((tile_n, d),
                             lambda s, t: (s * tiles_per_split + t, 0)),
                pl.BlockSpec((tile_n, d),
                             lambda s, t: (s * tiles_per_split + t, 0)),
            ],
            out_specs=[
                pl.BlockSpec((tile_n, 1), lambda s, t: (s, 0)),
                pl.BlockSpec((tile_n, 1), lambda s, t: (s, 0)),
            ],
        ),
        compiler_params=pltpu.CompilerParams(
            dimension_semantics=("parallel", "arbitrary"),
            vmem_limit_bytes=32 * 1024 * 1024,
        ),
    )(x, y)

    sum_sq = jnp.sum(sq_parts)
    sum_cos = jnp.sum(cos_parts)
    mse = sum_sq / jnp.float32(n * d)
    cos_loss = 1.0 - sum_cos / jnp.float32(n)

    # ---- L2 regularizer: packed slab + per-param offsets in SMEM -----------
    if params:
        flats = [jnp.ravel(p).astype(jnp.float32) for p in params]
        sizes = [int(f.shape[0]) for f in flats]
        offs = [0]
        for sz in sizes:
            offs.append(offs[-1] + sz)
        total_len = offs[-1]
        padded_len = _round_up(total_len, 8 * 128)
        flat = jnp.concatenate(flats)
        flat = jnp.pad(flat, (0, padded_len - total_len))
        slab = flat.reshape(-1, 128)
        # TODO(synk): grid the slab for models too large for a single VMEM block.

        l2_mat = pl.pallas_call(
            functools.partial(_l2_kernel, num_params=len(params)),
            out_shape=jax.ShapeDtypeStruct((1, 1), jnp.float32),
            in_specs=[
                pl.BlockSpec(memory_space=pltpu.MemorySpace.SMEM),
                pl.BlockSpec(memory_space=pltpu.MemorySpace.VMEM),
            ],
            out_specs=pl.BlockSpec(memory_space=pltpu.MemorySpace.VMEM),
        )(jnp.asarray(offs, dtype=jnp.int32), slab)
        l2_reg = l2_mat[0, 0]
    else:
        l2_reg = jnp.float32(0.0)

    return mse_weight * mse + cosine_weight * cos_loss + l2_weight * l2_reg


# -----------------------------------------------------------------------------
# Pure-JAX reference (mirrors the PyTorch module)
# -----------------------------------------------------------------------------
def _reference(output, target, params,
               mse_weight=MSE_WEIGHT, cosine_weight=COSINE_WEIGHT,
               l2_weight=L2_WEIGHT):
    x = output.astype(jnp.float32)
    y = target.astype(jnp.float32)
    mse = jnp.mean((x - y) ** 2)
    dot = jnp.sum(x * y, axis=1)
    nx = jnp.linalg.norm(x, axis=1)
    ny = jnp.linalg.norm(y, axis=1)
    cos = dot / jnp.maximum(nx * ny, _EPS)
    cos_loss = jnp.mean(1.0 - cos)
    l2 = sum(jnp.linalg.norm(p.astype(jnp.float32).ravel()) for p in params)
    return mse_weight * mse + cosine_weight * cos_loss + l2_weight * l2


if __name__ == "__main__":
    key = jax.random.PRNGKey(0)
    k_out, k_tgt, k_w1, k_b1, k_w2, k_b2, k_big = jax.random.split(key, 7)

    # Small shapes consistent with the module: batch of 8 embeddings, dim 32.
    n, d = 8, 32
    output = jax.random.normal(k_out, (n, d), dtype=jnp.float32)
    target = jax.random.normal(k_tgt, (n, d), dtype=jnp.float32)

    # Deterministic synthetic "model" parameters (stand-in for model.parameters()).
    params = [
        jax.random.normal(k_w1, (32, 64), dtype=jnp.float32) * 0.1,  # W1
        jax.random.normal(k_b1, (64,), dtype=jnp.float32) * 0.1,     # b1
        jax.random.normal(k_w2, (64, 16), dtype=jnp.float32) * 0.1,  # W2
        jax.random.normal(k_b2, (16,), dtype=jnp.float32) * 0.1,     # b2
    ]

    loss = jax.block_until_ready(regularized_combined_loss(output, target, params))
    ref = _reference(output, target, params)
    assert jnp.allclose(loss, ref, rtol=1e-5, atol=1e-5), (loss, ref)

    # Also exercise the multi-tile / two-split (megacore) streaming path.
    n2, d2 = 1024, 128
    big_out = jax.random.normal(k_big, (n2, d2), dtype=jnp.float32)
    big_tgt = big_out * 0.75 + 0.1
    loss2 = jax.block_until_ready(
        regularized_combined_loss(big_out, big_tgt, params))
    ref2 = _reference(big_out, big_tgt, params)
    assert jnp.allclose(loss2, ref2, rtol=1e-4, atol=1e-4), (loss2, ref2)

    print("KERNEL_OK")
</pallas_src>

<mosaic_0001>
module attributes {stable_mosaic.version = 11 : i64} {
  func.func @_partial_sums_kernel(%arg0: i32, %arg1: i32, %arg2: memref<8x32xf32, #tpu.memory_space<vmem>>, %arg3: memref<8x32xf32, #tpu.memory_space<vmem>>, %arg4: memref<8x1xf32, #tpu.memory_space<vmem>>, %arg5: memref<8x1xf32, #tpu.memory_space<vmem>>) attributes {dimension_semantics = [#tpu.dimension_semantics<parallel>, #tpu.dimension_semantics<arbitrary>], iteration_bounds = array<i64: 1, 1>, scalar_prefetch = 0 : i64, scratch_operands = 0 : i64, tpu.core_type = #tpu.core_type<tc>, window_params = [{transform_indices = @transform_0, window_bounds = array<i64: 8, 32>}, {transform_indices = @transform_1, window_bounds = array<i64: 8, 32>}, {transform_indices = @transform_2, window_bounds = array<i64: 8, 1>}, {transform_indices = @transform_3, window_bounds = array<i64: 8, 1>}]} {
    %c0_i32 = arith.constant 0 : i32
    %0 = arith.cmpi eq, %arg1, %c0_i32 : i32
    %1 = arith.extui %0 : i1 to i32
    %c0_i32_0 = arith.constant 0 : i32
    %2 = arith.cmpi ne, %1, %c0_i32_0 : i32
    scf.if %2 {
      %cst_16 = arith.constant 0.000000e+00 : f32
      %29 = vector.broadcast %cst_16 : f32 to vector<8x1xf32>
      %c0_17 = arith.constant 0 : index
      %c0_18 = arith.constant 0 : index
      %30 = vector.load %arg4[%c0_17, %c0_18] : memref<8x1xf32, #tpu.memory_space<vmem>>, vector<8x1xf32>
      tpu.vector_store %arg4[%c0_17, %c0_18], %29 {strides = array<i32>} : memref<8x1xf32, #tpu.memory_space<vmem>>, vector<8x1xf32>,
      %cst_19 = arith.constant 0.000000e+00 : f32
      %31 = vector.broadcast %cst_19 : f32 to vector<8x1xf32>
      %c0_20 = arith.constant 0 : index
      %c0_21 = arith.constant 0 : index
      %32 = vector.load %arg5[%c0_20, %c0_21] : memref<8x1xf32, #tpu.memory_space<vmem>>, vector<8x1xf32>
      tpu.vector_store %arg5[%c0_20, %c0_21], %31 {strides = array<i32>} : memref<8x1xf32, #tpu.memory_space<vmem>>, vector<8x1xf32>,
    } else {
    }
    %c0 = arith.constant 0 : index
    %c0_1 = arith.constant 0 : index
    %3 = vector.load %arg2[%c0, %c0_1] : memref<8x32xf32, #tpu.memory_space<vmem>>, vector<8x32xf32>
    %c0_2 = arith.constant 0 : index
    %c0_3 = arith.constant 0 : index
    %4 = vector.load %arg3[%c0_2, %c0_3] : memref<8x32xf32, #tpu.memory_space<vmem>>, vector<8x32xf32>
    %5 = arith.mulf %3, %3 : vector<8x32xf32>
    %cst = arith.constant dense<0.000000e+00> : vector<8xf32>
    %6 = vector.multi_reduction <add>, %5, %cst [1] : vector<8x32xf32> to vector<8xf32>
    %7 = vector.shape_cast %6 : vector<8xf32> to vector<8x1xf32>
    %8 = arith.mulf %4, %4 : vector<8x32xf32>
    %cst_4 = arith.constant dense<0.000000e+00> : vector<8xf32>
    %9 = vector.multi_reduction <add>, %8, %cst_4 [1] : vector<8x32xf32> to vector<8xf32>
    %10 = vector.shape_cast %9 : vector<8xf32> to vector<8x1xf32>
    %11 = arith.mulf %3, %4 : vector<8x32xf32>
    %cst_5 = arith.constant dense<0.000000e+00> : vector<8xf32>
    %12 = vector.multi_reduction <add>, %11, %cst_5 [1] : vector<8x32xf32> to vector<8xf32>
    %13 = vector.shape_cast %12 : vector<8xf32> to vector<8x1xf32>
    %c0_6 = arith.constant 0 : index
    %c0_7 = arith.constant 0 : index
    %14 = vector.load %arg4[%c0_6, %c0_7] : memref<8x1xf32, #tpu.memory_space<vmem>>, vector<8x1xf32>
    %cst_8 = arith.constant 2.000000e+00 : f32
    %15 = vector.broadcast %cst_8 : f32 to vector<8x1xf32>
    %16 = arith.mulf %15, %13 : vector<8x1xf32>
    %17 = arith.subf %7, %16 : vector<8x1xf32>
    %18 = arith.addf %17, %10 : vector<8x1xf32>
    %19 = arith.addf %14, %18 : vector<8x1xf32>
    %c0_9 = arith.constant 0 : index
    %c0_10 = arith.constant 0 : index
    %20 = vector.load %arg4[%c0_9, %c0_10] : memref<8x1xf32, #tpu.memory_space<vmem>>, vector<8x1xf32>
    tpu.vector_store %arg4[%c0_9, %c0_10], %19 {strides = array<i32>} : memref<8x1xf32, #tpu.memory_space<vmem>>, vector<8x1xf32>,
    %c0_11 = arith.constant 0 : index
    %c0_12 = arith.constant 0 : index
    %21 = vector.load %arg5[%c0_11, %c0_12] : memref<8x1xf32, #tpu.memory_space<vmem>>, vector<8x1xf32>
    %22 = arith.mulf %7, %10 : vector<8x1xf32>
    %cst_13 = arith.constant 1.000000e-16 : f32
    %23 = vector.broadcast %cst_13 : f32 to vector<8x1xf32>
    %24 = arith.maximumf %22, %23 : vector<8x1xf32>
    %25 = math.rsqrt %24 : vector<8x1xf32>
    %26 = arith.mulf %13, %25 : vector<8x1xf32>
    %27 = arith.addf %21, %26 : vector<8x1xf32>
    %c0_14 = arith.constant 0 : index
    %c0_15 = arith.constant 0 : index
    %28 = vector.load %arg5[%c0_14, %c0_15] : memref<8x1xf32, #tpu.memory_space<vmem>>, vector<8x1xf32>
    tpu.vector_store %arg5[%c0_14, %c0_15], %27 {strides = array<i32>} : memref<8x1xf32, #tpu.memory_space<vmem>>, vector<8x1xf32>,
    return
  }
  func.func @transform_0(%arg0: i32, %arg1: i32) -> (i32, i32) {
    %c1_i32 = arith.constant 1 : i32
    %0 = arith.muli %arg0, %c1_i32 : i32
    %1 = arith.addi %0, %arg1 : i32
    %c0_i32 = arith.constant 0 : i32
    %c0_i32_0 = arith.constant 0 : i32
    return %1, %c0_i32 : i32, i32
  }
  func.func @transform_1(%arg0: i32, %arg1: i32) -> (i32, i32) {
    %c1_i32 = arith.constant 1 : i32
    %0 = arith.muli %arg0, %c1_i32 : i32
    %1 = arith.addi %0, %arg1 : i32
    %c0_i32 = arith.constant 0 : i32
    %c0_i32_0 = arith.constant 0 : i32
    return %1, %c0_i32 : i32, i32
  }
  func.func @transform_2(%arg0: i32, %arg1: i32) -> (i32, i32) {
    %c0_i32 = arith.constant 0 : i32
    %c0_i32_0 = arith.constant 0 : i32
    return %arg0, %c0_i32 : i32, i32
  }
  func.func @transform_3(%arg0: i32, %arg1: i32) -> (i32, i32) {
    %c0_i32 = arith.constant 0 : i32
    %c0_i32_0 = arith.constant 0 : i32
    return %arg0, %c0_i32 : i32, i32
  }
}

</mosaic_0001>

<llo_original>
// kernel: tpu_custom_call.1
$region0: #{tpu_custom_call.1}
  #allocation0 [shape = 'u32[]', space=smem, size = 0x4, offset = 0x4, fixed_abs, tag = 'smem constant byte address 0x4 - core index']
  #allocation1 [shape = 'u32[144,128]{1,0:T(1,128)}', space=vmem, size = 0x12000, scoped, tag = 'internal scratch']
  %s0 = inlined_call_operand.hbm [shape: f32[8,32], index: 0, kind: input, shape index: {}]
  %s1 = inlined_call_operand.hbm [shape: f32[8,32], index: 1, kind: input, shape index: {}]
  %s2 = inlined_call_operand.vmem [shape: f32[8,1], index: 2, kind: output, shape index: {0}]
  %s3 = inlined_call_operand.vmem [shape: f32[8,1], index: 3, kind: output, shape index: {1}]
  %4 = xla_tuple %s2, %s3
  %s5 = sld [smem:[#allocation0]]
  $region38: #{tpu_custom_call.1} parent=0
    _
  %s7 = ssub.s32 1, %s5
  %s8 = scalar_select 0, %s7, %s5
  $region1: #{tpu_custom_call.1} parent=0
    #allocation2 [shape = 'u8[4096]{0}', space=vmem, size = 0x1000, scoped, tag = 'input window, operand 0, single buffered']
    #allocation3 [shape = 's32[1]{0}', space=sflag, size = 0x4, scoped, tag = 'scoped memory for tpu_custom_call.1']
    #allocation4 [shape = 'u8[4096]{0}', space=vmem, size = 0x1000, scoped, tag = 'input window, operand 1, single buffered']
    #allocation5 [shape = 's32[1]{0}', space=sflag, size = 0x4, scoped, tag = 'scoped memory for tpu_custom_call.1']
    %9 = vsyncpa [#allocation3], 0
    %10 = vsyncpa [#allocation5], 0
    // Predicated region
    $region2: #{tpu_custom_call.1} parent=1 // pred_check
      _
    $region3: #{tpu_custom_call.1} parent=1 // pred_check_branch
      %12 = sbr.rel (0) target = $region5
    $region4: #{tpu_custom_call.1} parent=1 // pred_region
      %s13 = sadd.s32 0, 0
      %s15 = ssub.s32 128, 128
      %16 = vsyncadd [#allocation3], %s15
      %s17 = smul.addr %s13, 128
      %s18 = scalar_lea.hbm %s0, %s17
      %s20 = sshll.u32 [#allocation2], 4
      %s21 = int_to_ptr.vmem [resolvable:$true] %s20
      %23 = dma.hbm_to_vmem [thread:$0]  %s18, 128, %s21, [#allocation3]
    $region5: #{tpu_custom_call.1} parent=1 // pred_fallthru
      _
    // Predicated region
    $region6: #{tpu_custom_call.1} parent=1 // pred_check
      _
    $region7: #{tpu_custom_call.1} parent=1 // pred_check_branch
      %25 = sbr.rel (0) target = $region9
    $region8: #{tpu_custom_call.1} parent=1 // pred_region
      %s26 = sadd.s32 0, 0
      %s28 = ssub.s32 128, 128
      %29 = vsyncadd [#allocation5], %s28
      %s30 = smul.addr %s26, 128
      %s31 = scalar_lea.hbm %s1, %s30
      %s33 = sshll.u32 [#allocation4], 4
      %s34 = int_to_ptr.vmem [resolvable:$true] %s33
      %36 = dma.hbm_to_vmem [thread:$0]  %s31, 128, %s34, [#allocation5]
    $region9: #{tpu_custom_call.1} parent=1 // pred_fallthru
      _
    // Predicated region
    $region10: #{tpu_custom_call.1} parent=1 // pred_check
      _
    $region11: #{tpu_custom_call.1} parent=1 // pred_check_branch
      %38 = sbr.rel (0) target = $region13
    $region12: #{tpu_custom_call.1} parent=1 // pred_region
      %39 = dma.done [#allocation3], 128
    $region13: #{tpu_custom_call.1} parent=1 // pred_fallthru
      _
    // Predicated region
    $region14: #{tpu_custom_call.1} parent=1 // pred_check
      _
    $region15: #{tpu_custom_call.1} parent=1 // pred_check_branch
      %41 = sbr.rel (0) target = $region17
    $region16: #{tpu_custom_call.1} parent=1 // pred_region
      %42 = dma.done [#allocation5], 128
    $region17: #{tpu_custom_call.1} parent=1 // pred_fallthru
      _
    %s43 = sadd.s32 0, 0
    %s44 = sadd.s32 0, 0
    %p45 = scmp.eq.s32.totalorder 0, 0
    // Predicated region
    $region18: #{tpu_custom_call.1} parent=1 // pred_check
      %p46 = pneg %p45
    $region19: #{tpu_custom_call.1} parent=1 // pred_check_branch
      %48 = sbr.rel (%p46) target = $region21
    $region20: #{tpu_custom_call.1} parent=1 // pred_region
      %vm49 = vcmask 7168
      %50 = vst.msk [vmem:[%s2] sm:$0xff] %vm49, 0.0
      %51 = vst.msk [vmem:[%s3] sm:$0xff] %vm49, 0.0
    $region21: #{tpu_custom_call.1} parent=1 // pred_fallthru
      _
    %v52 = vld [vmem:[#allocation2] sm:$0xff]
    %v53 = vld [vmem:[#allocation4] sm:$0xff]
    %v54 = vmul.f32 %v52, %v52
    %vm55 = vcmask 261120
    %v56 = vsel %vm55, %v54, 0.0
    %57 = vadd.xlane.f32.xlu0 %v56
    %v58 = vpop.xlane.xlu0 %57
    %v59 = vmul.f32 %v53, %v53
    %v60 = vsel %vm55, %v59, 0.0
    %61 = vadd.xlane.f32.xlu0 %v60
    %v62 = vpop.xlane.xlu0 %61
    %v63 = vmul.f32 %v52, %v53
    %v64 = vsel %vm55, %v63, 0.0
    %65 = vadd.xlane.f32.xlu0 %v64
    %v66 = vpop.xlane.xlu0 %65
    %v67 = vld [vmem:[%s2] sm:$0xff]
    %v68 = vmul.f32 %v66, 2.0
    %v69 = vsub.f32 %v58, %v68
    %v70 = vadd.f32 %v69, %v62
    %v71 = vadd.f32 %v67, %v70
    %vm72 = vcmask 7168
    %73 = vst.msk [vmem:[%s2] sm:$0xff] %vm72, %v71
    %v74 = vld [vmem:[%s3] sm:$0xff]
    %v75 = vmul.f32 %v58, %v62
    %v76 = vmax.f32 %v75, 1e-16
    %v77 = vrsqrt.pop %v76
    %v78 = vmul.f32 %v66, %v77
    %v79 = vadd.f32 %v74, %v78
    %80 = vst.msk [vmem:[%s3] sm:$0xff] %vm72, %v79
    // Predicated region
    $region22: #{tpu_custom_call.1} parent=1 // pred_check
      _
    $region23: #{tpu_custom_call.1} parent=1 // pred_check_branch
      %82 = sbr.rel (0) target = $region25
    $region24: #{tpu_custom_call.1} parent=1 // pred_region
      _
    $region25: #{tpu_custom_call.1} parent=1 // pred_fallthru
      _
    // Predicated region
    $region26: #{tpu_custom_call.1} parent=1 // pred_check
      _
    $region27: #{tpu_custom_call.1} parent=1 // pred_check_branch
      %84 = sbr.rel (0) target = $region29
    $region28: #{tpu_custom_call.1} parent=1 // pred_region
      _
    $region29: #{tpu_custom_call.1} parent=1 // pred_fallthru
      _
    // Predicated region
    $region30: #{tpu_custom_call.1} parent=1 // pred_check
      _
    $region31: #{tpu_custom_call.1} parent=1 // pred_check_branch
      %86 = sbr.rel (0) target = $region33
    $region32: #{tpu_custom_call.1} parent=1 // pred_region
      _
    $region33: #{tpu_custom_call.1} parent=1 // pred_fallthru
      _
    // Predicated region
    $region34: #{tpu_custom_call.1} parent=1 // pred_check
      _
    $region35: #{tpu_custom_call.1} parent=1 // pred_check_branch
      %88 = sbr.rel (0) target = $region37
    $region36: #{tpu_custom_call.1} parent=1 // pred_region
      _
    $region37: #{tpu_custom_call.1} parent=1 // pred_fallthru
      _
    %89 = vsyncpa [#allocation3], 1
    %90 = vsyncpa [#allocation5], 1

</llo_original>
